<compile_context>
chip_gen: v7x
topology: tpu7x:2x2x1
jax: 0.10.0
libtpu: 0.0.40
codegen_flags: <defaults>
</compile_context>

<pallas_src>
import math

import jax
import jax.numpy as jnp
from jax.experimental import pallas as pl
from jax.experimental.pallas import tpu as pltpu


def _gcn_kernel(a_ref, x_ref, w_ref, o_ref):
    # a_ref: (B, W, N, N)   x_ref: (B, W, N, F_in)
    # w_ref: (W, F_in, F_out)   o_ref: (B, W, N, F_out)
    B, W, N, F_in = x_ref.shape
    F_out = w_ref.shape[-1]

    a = a_ref[...]          # (B, W, N, N)   f32
    x = x_ref[...]          # (B, W, N, F_in) f32
    wts = w_ref[...]        # (W, F_in, F_out) f32

    for w in range(W):      # static unroll; W is small and shapes are static
        # Weight stage first:  (A @ X) @ Wt == A @ (X @ Wt).  Flatten the batch
        # into sublanes so this is one (B*N, F_in) @ (F_in, F_out) MXU dot.
        xw = jnp.dot(
            x[:, w].reshape(B * N, F_in),
            wts[w],
            preferred_element_type=jnp.float32,
        )
        # Adjacency stage: single batched matmul over B for this window.
        out_w = jnp.einsum(
            "bij,bjo->bio",
            a[:, w],
            xw.reshape(B, N, F_out),
            preferred_element_type=jnp.float32,
        )
        o_ref[:, w] = out_w.astype(o_ref.dtype)


def graph_convolution(adjacency, nodes, weights):
    """output[b, w] = adjacency[b, w] @ nodes[b, w] @ weights[w]  (f32)."""
    B, W, N, _ = adjacency.shape
    F_out = weights.shape[-1]

    return pl.pallas_call(
        _gcn_kernel,
        out_shape=jax.ShapeDtypeStruct((B, W, N, F_out), jnp.float32),
        # Single grid step: every operand is a full-array VMEM-resident block
        # (no per-step pipeline epochs for this tiny, overhead-bound problem).
        in_specs=[
            pl.BlockSpec(memory_space=pltpu.MemorySpace.VMEM),
            pl.BlockSpec(memory_space=pltpu.MemorySpace.VMEM),
            pl.BlockSpec(memory_space=pltpu.MemorySpace.VMEM),
        ],
        out_specs=pl.BlockSpec(memory_space=pltpu.MemorySpace.VMEM),
    )(adjacency, nodes, weights)


def xavier_uniform(key, window_size, in_features, out_features, dtype=jnp.float32):
    # PyTorch xavier_uniform_ on a (window, in, out) tensor:
    #   receptive_field = out_features
    #   fan_in  = size(1) * receptive_field = in_features * out_features
    #   fan_out = size(0) * receptive_field = window_size * out_features
    fan_in = in_features * out_features
    fan_out = window_size * out_features
    bound = math.sqrt(6.0 / (fan_in + fan_out))
    return jax.random.uniform(
        key, (window_size, in_features, out_features),
        dtype=dtype, minval=-bound, maxval=bound)


if __name__ == "__main__":
    key = jax.random.PRNGKey(0)
    k_a, k_x, k_w = jax.random.split(key, 3)

    batch, window, n_nodes = 2, 4, 16
    in_features, out_features = 32, 32

    adjacency = jax.random.normal(
        k_a, (batch, window, n_nodes, n_nodes), jnp.float32)
    nodes = jax.random.normal(
        k_x, (batch, window, n_nodes, in_features), jnp.float32)
    weights = xavier_uniform(k_w, window, in_features, out_features)

    out = graph_convolution(adjacency, nodes, weights)
    out = jax.block_until_ready(out)
    assert out.shape == (batch, window, n_nodes, out_features)

    # Pure f32 reference matching the PyTorch forward.
    ref = jnp.einsum("bwij,bwjk,wkl->bwil", adjacency, nodes, weights)
    max_err = float(jnp.max(jnp.abs(out - ref)))
    assert jnp.allclose(out, ref, atol=1e-3, rtol=1e-3), max_err

    print("KERNEL_OK")
</pallas_src>

<mosaic_0001>
module attributes {stable_mosaic.version = 11 : i64} {
  func.func @_gcn_kernel(%arg0: memref<2x4x16x16xf32, #tpu.memory_space<vmem>>, %arg1: memref<2x4x16x32xf32, #tpu.memory_space<vmem>>, %arg2: memref<4x32x32xf32, #tpu.memory_space<vmem>>, %arg3: memref<2x4x16x32xf32, #tpu.memory_space<vmem>>) attributes {dimension_semantics = [], scalar_prefetch = 0 : i64, scratch_operands = 0 : i64, tpu.core_type = #tpu.core_type<tc>} {
    %c0 = arith.constant 0 : index
    %c0_0 = arith.constant 0 : index
    %c0_1 = arith.constant 0 : index
    %c0_2 = arith.constant 0 : index
    %0 = vector.load %arg0[%c0, %c0_0, %c0_1, %c0_2] : memref<2x4x16x16xf32, #tpu.memory_space<vmem>>, vector<2x4x16x16xf32>
    %c0_3 = arith.constant 0 : index
    %c0_4 = arith.constant 0 : index
    %c0_5 = arith.constant 0 : index
    %c0_6 = arith.constant 0 : index
    %1 = vector.load %arg1[%c0_3, %c0_4, %c0_5, %c0_6] : memref<2x4x16x32xf32, #tpu.memory_space<vmem>>, vector<2x4x16x32xf32>
    %c0_7 = arith.constant 0 : index
    %c0_8 = arith.constant 0 : index
    %c0_9 = arith.constant 0 : index
    %2 = vector.load %arg2[%c0_7, %c0_8, %c0_9] : memref<4x32x32xf32, #tpu.memory_space<vmem>>, vector<4x32x32xf32>
    %3 = vector.extract_strided_slice %1 {offsets = [0, 0, 0, 0], sizes = [2, 1, 16, 32], strides = [1, 1, 1, 1]} : vector<2x4x16x32xf32> to vector<2x1x16x32xf32>
    %4 = vector.shape_cast %3 : vector<2x1x16x32xf32> to vector<2x16x32xf32>
    %5 = vector.shape_cast %4 : vector<2x16x32xf32> to vector<32x32xf32>
    %6 = vector.extract_strided_slice %2 {offsets = [0, 0, 0], sizes = [1, 32, 32], strides = [1, 1, 1]} : vector<4x32x32xf32> to vector<1x32x32xf32>
    %7 = vector.shape_cast %6 : vector<1x32x32xf32> to vector<32x32xf32>
    %cst = arith.constant dense<0.000000e+00> : vector<32x32xf32>
    %8 = tpu.matmul %5, %7, %cst {dimension_numbers = #tpu.dot_dimension_numbers<[1], [0], [0], [1], [0, 0, 1, 1], [], []>} : vector<32x32xf32>, vector<32x32xf32>, vector<32x32xf32> -> vector<32x32xf32>
    %9 = vector.extract_strided_slice %0 {offsets = [0, 0, 0, 0], sizes = [2, 1, 16, 16], strides = [1, 1, 1, 1]} : vector<2x4x16x16xf32> to vector<2x1x16x16xf32>
    %10 = vector.shape_cast %9 : vector<2x1x16x16xf32> to vector<2x16x16xf32>
    %11 = vector.shape_cast %8 : vector<32x32xf32> to vector<2x16x32xf32>
    "tpu.trace_start"() <{level = 10 : i32, message = "bij,bjo->bio"}> : () -> ()
    %cst_10 = arith.constant dense<0.000000e+00> : vector<2x16x32xf32>
    %12 = tpu.matmul %10, %11, %cst_10 {dimension_numbers = #tpu.dot_dimension_numbers<[2], [1], [1], [2], [0, 0, 0, 1, 1, 2], [0], [0]>} : vector<2x16x16xf32>, vector<2x16x32xf32>, vector<2x16x32xf32> -> vector<2x16x32xf32>
    "tpu.trace_stop"() : () -> ()
    %c0_11 = arith.constant 0 : index
    %c0_12 = arith.constant 0 : index
    %c0_13 = arith.constant 0 : index
    %c0_14 = arith.constant 0 : index
    %13 = vector.load %arg3[%c0_11, %c0_12, %c0_13, %c0_14] : memref<2x4x16x32xf32, #tpu.memory_space<vmem>>, vector<2x1x16x32xf32>
    %14 = vector.shape_cast %13 : vector<2x1x16x32xf32> to vector<2x16x32xf32>
    %15 = vector.shape_cast %12 : vector<2x16x32xf32> to vector<2x1x16x32xf32>
    tpu.vector_store %arg3[%c0_11, %c0_12, %c0_13, %c0_14], %15 {strides = array<i32>} : memref<2x4x16x32xf32, #tpu.memory_space<vmem>>, vector<2x1x16x32xf32>,
    %16 = vector.extract_strided_slice %1 {offsets = [0, 1, 0, 0], sizes = [2, 1, 16, 32], strides = [1, 1, 1, 1]} : vector<2x4x16x32xf32> to vector<2x1x16x32xf32>
    %17 = vector.shape_cast %16 : vector<2x1x16x32xf32> to vector<2x16x32xf32>
    %18 = vector.shape_cast %17 : vector<2x16x32xf32> to vector<32x32xf32>
    %19 = vector.extract_strided_slice %2 {offsets = [1, 0, 0], sizes = [1, 32, 32], strides = [1, 1, 1]} : vector<4x32x32xf32> to vector<1x32x32xf32>
    %20 = vector.shape_cast %19 : vector<1x32x32xf32> to vector<32x32xf32>
    %cst_15 = arith.constant dense<0.000000e+00> : vector<32x32xf32>
    %21 = tpu.matmul %18, %20, %cst_15 {dimension_numbers = #tpu.dot_dimension_numbers<[1], [0], [0], [1], [0, 0, 1, 1], [], []>} : vector<32x32xf32>, vector<32x32xf32>, vector<32x32xf32> -> vector<32x32xf32>
    %22 = vector.extract_strided_slice %0 {offsets = [0, 1, 0, 0], sizes = [2, 1, 16, 16], strides = [1, 1, 1, 1]} : vector<2x4x16x16xf32> to vector<2x1x16x16xf32>
    %23 = vector.shape_cast %22 : vector<2x1x16x16xf32> to vector<2x16x16xf32>
    %24 = vector.shape_cast %21 : vector<32x32xf32> to vector<2x16x32xf32>
    "tpu.trace_start"() <{level = 10 : i32, message = "bij,bjo->bio"}> : () -> ()
    %cst_16 = arith.constant dense<0.000000e+00> : vector<2x16x32xf32>
    %25 = tpu.matmul %23, %24, %cst_16 {dimension_numbers = #tpu.dot_dimension_numbers<[2], [1], [1], [2], [0, 0, 0, 1, 1, 2], [0], [0]>} : vector<2x16x16xf32>, vector<2x16x32xf32>, vector<2x16x32xf32> -> vector<2x16x32xf32>
    "tpu.trace_stop"() : () -> ()
    %c0_17 = arith.constant 0 : index
    %c1 = arith.constant 1 : index
    %c0_18 = arith.constant 0 : index
    %c0_19 = arith.constant 0 : index
    %26 = vector.load %arg3[%c0_17, %c1, %c0_18, %c0_19] : memref<2x4x16x32xf32, #tpu.memory_space<vmem>>, vector<2x1x16x32xf32>
    %27 = vector.shape_cast %26 : vector<2x1x16x32xf32> to vector<2x16x32xf32>
    %28 = vector.shape_cast %25 : vector<2x16x32xf32> to vector<2x1x16x32xf32>
    tpu.vector_store %arg3[%c0_17, %c1, %c0_18, %c0_19], %28 {strides = array<i32>} : memref<2x4x16x32xf32, #tpu.memory_space<vmem>>, vector<2x1x16x32xf32>,
    %29 = vector.extract_strided_slice %1 {offsets = [0, 2, 0, 0], sizes = [2, 1, 16, 32], strides = [1, 1, 1, 1]} : vector<2x4x16x32xf32> to vector<2x1x16x32xf32>
    %30 = vector.shape_cast %29 : vector<2x1x16x32xf32> to vector<2x16x32xf32>
    %31 = vector.shape_cast %30 : vector<2x16x32xf32> to vector<32x32xf32>
    %32 = vector.extract_strided_slice %2 {offsets = [2, 0, 0], sizes = [1, 32, 32], strides = [1, 1, 1]} : vector<4x32x32xf32> to vector<1x32x32xf32>
    %33 = vector.shape_cast %32 : vector<1x32x32xf32> to vector<32x32xf32>
    %cst_20 = arith.constant dense<0.000000e+00> : vector<32x32xf32>
    %34 = tpu.matmul %31, %33, %cst_20 {dimension_numbers = #tpu.dot_dimension_numbers<[1], [0], [0], [1], [0, 0, 1, 1], [], []>} : vector<32x32xf32>, vector<32x32xf32>, vector<32x32xf32> -> vector<32x32xf32>
    %35 = vector.extract_strided_slice %0 {offsets = [0, 2, 0, 0], sizes = [2, 1, 16, 16], strides = [1, 1, 1, 1]} : vector<2x4x16x16xf32> to vector<2x1x16x16xf32>
    %36 = vector.shape_cast %35 : vector<2x1x16x16xf32> to vector<2x16x16xf32>
    %37 = vector.shape_cast %34 : vector<32x32xf32> to vector<2x16x32xf32>
    "tpu.trace_start"() <{level = 10 : i32, message = "bij,bjo->bio"}> : () -> ()
    %cst_21 = arith.constant dense<0.000000e+00> : vector<2x16x32xf32>
    %38 = tpu.matmul %36, %37, %cst_21 {dimension_numbers = #tpu.dot_dimension_numbers<[2], [1], [1], [2], [0, 0, 0, 1, 1, 2], [0], [0]>} : vector<2x16x16xf32>, vector<2x16x32xf32>, vector<2x16x32xf32> -> vector<2x16x32xf32>
    "tpu.trace_stop"() : () -> ()
    %c0_22 = arith.constant 0 : index
    %c2 = arith.constant 2 : index
    %c0_23 = arith.constant 0 : index
    %c0_24 = arith.constant 0 : index
    %39 = vector.load %arg3[%c0_22, %c2, %c0_23, %c0_24] : memref<2x4x16x32xf32, #tpu.memory_space<vmem>>, vector<2x1x16x32xf32>
    %40 = vector.shape_cast %39 : vector<2x1x16x32xf32> to vector<2x16x32xf32>
    %41 = vector.shape_cast %38 : vector<2x16x32xf32> to vector<2x1x16x32xf32>
    tpu.vector_store %arg3[%c0_22, %c2, %c0_23, %c0_24], %41 {strides = array<i32>} : memref<2x4x16x32xf32, #tpu.memory_space<vmem>>, vector<2x1x16x32xf32>,
    %42 = vector.extract_strided_slice %1 {offsets = [0, 3, 0, 0], sizes = [2, 1, 16, 32], strides = [1, 1, 1, 1]} : vector<2x4x16x32xf32> to vector<2x1x16x32xf32>
    %43 = vector.shape_cast %42 : vector<2x1x16x32xf32> to vector<2x16x32xf32>
    %44 = vector.shape_cast %43 : vector<2x16x32xf32> to vector<32x32xf32>
    %45 = vector.extract_strided_slice %2 {offsets = [3, 0, 0], sizes = [1, 32, 32], strides = [1, 1, 1]} : vector<4x32x32xf32> to vector<1x32x32xf32>
    %46 = vector.shape_cast %45 : vector<1x32x32xf32> to vector<32x32xf32>
    %cst_25 = arith.constant dense<0.000000e+00> : vector<32x32xf32>
    %47 = tpu.matmul %44, %46, %cst_25 {dimension_numbers = #tpu.dot_dimension_numbers<[1], [0], [0], [1], [0, 0, 1, 1], [], []>} : vector<32x32xf32>, vector<32x32xf32>, vector<32x32xf32> -> vector<32x32xf32>
    %48 = vector.extract_strided_slice %0 {offsets = [0, 3, 0, 0], sizes = [2, 1, 16, 16], strides = [1, 1, 1, 1]} : vector<2x4x16x16xf32> to vector<2x1x16x16xf32>
    %49 = vector.shape_cast %48 : vector<2x1x16x16xf32> to vector<2x16x16xf32>
    %50 = vector.shape_cast %47 : vector<32x32xf32> to vector<2x16x32xf32>
    "tpu.trace_start"() <{level = 10 : i32, message = "bij,bjo->bio"}> : () -> ()
    %cst_26 = arith.constant dense<0.000000e+00> : vector<2x16x32xf32>
    %51 = tpu.matmul %49, %50, %cst_26 {dimension_numbers = #tpu.dot_dimension_numbers<[2], [1], [1], [2], [0, 0, 0, 1, 1, 2], [0], [0]>} : vector<2x16x16xf32>, vector<2x16x32xf32>, vector<2x16x32xf32> -> vector<2x16x32xf32>
    "tpu.trace_stop"() : () -> ()
    %c0_27 = arith.constant 0 : index
    %c3 = arith.constant 3 : index
    %c0_28 = arith.constant 0 : index
    %c0_29 = arith.constant 0 : index
    %52 = vector.load %arg3[%c0_27, %c3, %c0_28, %c0_29] : memref<2x4x16x32xf32, #tpu.memory_space<vmem>>, vector<2x1x16x32xf32>
    %53 = vector.shape_cast %52 : vector<2x1x16x32xf32> to vector<2x16x32xf32>
    %54 = vector.shape_cast %51 : vector<2x16x32xf32> to vector<2x1x16x32xf32>
    tpu.vector_store %arg3[%c0_27, %c3, %c0_28, %c0_29], %54 {strides = array<i32>} : memref<2x4x16x32xf32, #tpu.memory_space<vmem>>, vector<2x1x16x32xf32>,
    return
  }
}

</mosaic_0001>

<llo_original>
// kernel: tpu_custom_call.1
$region0: #{tpu_custom_call.1}
  #allocation0 [shape = 'u32[]', space=smem, size = 0x4, offset = 0x4, fixed_abs, tag = 'smem constant byte address 0x4 - core index']
  #allocation1 [shape = 'u32[144,128]{1,0:T(1,128)}', space=vmem, size = 0x12000, scoped, tag = 'internal scratch']
  %s0 = inlined_call_operand.hbm [shape: f32[2,4,16,16], index: 0, kind: input, shape index: {}]
  %s1 = inlined_call_operand.hbm [shape: f32[2,4,16,32], index: 1, kind: input, shape index: {}]
  %s2 = inlined_call_operand.hbm [shape: f32[4,32,32], index: 2, kind: input, shape index: {}]
  %s3 = inlined_call_operand.hbm [shape: f32[2,4,16,32], index: 3, kind: output, shape index: {}]
  %s4 = sld [smem:[#allocation0]]
  $region34: #{tpu_custom_call.1} parent=0
    _
  %s6 = ssub.s32 1, %s4
  %s7 = scalar_select 0, %s6, %s4
  $region1: #{tpu_custom_call.1} parent=0
    #allocation2 [shape = 'u8[65536]{0}', space=vmem, size = 0x10000, scoped, tag = 'input window, operand 0, single buffered']
    #allocation3 [shape = 's32[1]{0}', space=sflag, size = 0x4, scoped, tag = 'scoped memory for tpu_custom_call.1']
    #allocation4 [shape = 's32[1]{0}', space=sflag, size = 0x4, scoped, tag = 'scoped memory for tpu_custom_call.1']
    #allocation5 [shape = 'u8[65536]{0}', space=vmem, size = 0x10000, scoped, tag = 'input window, operand 1, single buffered']
    #allocation6 [shape = 's32[1]{0}', space=sflag, size = 0x4, scoped, tag = 'scoped memory for tpu_custom_call.1']
    #allocation7 [shape = 'u8[65536]{0}', space=vmem, size = 0x10000, scoped, tag = 'input window, operand 2, single buffered']
    #allocation8 [shape = 'u8[65536]{0}', space=vmem, size = 0x10000, scoped, tag = 'output window, operand 0, single buffered']
    %8 = vsyncpa [#allocation3], 0
    %9 = vsyncpa [#allocation6], 0
    %10 = vsyncpa [#allocation4], 0
    // Predicated region
    $region2: #{tpu_custom_call.1} parent=1 // pred_check
      _
    $region3: #{tpu_custom_call.1} parent=1 // pred_check_branch
      %12 = sbr.rel (0) target = $region5
    $region4: #{tpu_custom_call.1} parent=1 // pred_region
      %s14 = ssub.s32 2048, 2048
      %15 = vsyncadd [#allocation3], %s14
      %s16 = sshll.u32 [#allocation2], 4
      %s17 = int_to_ptr.vmem [resolvable:$true] %s16
      %22 = dma.hbm_to_vmem [thread:$0]  %s0, 2048, %s17, [#allocation3], 128, 128, 8
    $region5: #{tpu_custom_call.1} parent=1 // pred_fallthru
      _
    // Predicated region
    $region6: #{tpu_custom_call.1} parent=1 // pred_check
      _
    $region7: #{tpu_custom_call.1} parent=1 // pred_check_branch
      %24 = sbr.rel (0) target = $region9
    $region8: #{tpu_custom_call.1} parent=1 // pred_region
      %s26 = ssub.s32 2048, 2048
      %27 = vsyncadd [#allocation6], %s26
      %s28 = sshll.u32 [#allocation5], 4
      %s29 = int_to_ptr.vmem [resolvable:$true] %s28
      %34 = dma.hbm_to_vmem [thread:$0]  %s1, 2048, %s29, [#allocation6], 128, 128, 8
    $region9: #{tpu_custom_call.1} parent=1 // pred_fallthru
      _
    // Predicated region
    $region10: #{tpu_custom_call.1} parent=1 // pred_check
      _
    $region11: #{tpu_custom_call.1} parent=1 // pred_check_branch
      %36 = sbr.rel (0) target = $region13
    $region12: #{tpu_custom_call.1} parent=1 // pred_region
      %s38 = ssub.s32 2048, 2048
      %39 = vsyncadd [#allocation6], %s38
      %s40 = sshll.u32 [#allocation7], 4
      %s41 = int_to_ptr.vmem [resolvable:$true] %s40
      %46 = dma.hbm_to_vmem [thread:$0]  %s2, 2048, %s41, [#allocation6], 128, 128, 8
    $region13: #{tpu_custom_call.1} parent=1 // pred_fallthru
      _
    // Predicated region
    $region14: #{tpu_custom_call.1} parent=1 // pred_check
      _
    $region15: #{tpu_custom_call.1} parent=1 // pred_check_branch
      %48 = sbr.rel (0) target = $region17
    $region16: #{tpu_custom_call.1} parent=1 // pred_region
      %49 = dma.done [#allocation3], 2048
    $region17: #{tpu_custom_call.1} parent=1 // pred_fallthru
      _
    // Predicated region
    $region18: #{tpu_custom_call.1} parent=1 // pred_check
      _
    $region19: #{tpu_custom_call.1} parent=1 // pred_check_branch
      %51 = sbr.rel (0) target = $region21
    $region20: #{tpu_custom_call.1} parent=1 // pred_region
      %52 = dma.done [#allocation6], 2048
    $region21: #{tpu_custom_call.1} parent=1 // pred_fallthru
      _
    // Predicated region
    $region22: #{tpu_custom_call.1} parent=1 // pred_check
      _
    $region23: #{tpu_custom_call.1} parent=1 // pred_check_branch
      %54 = sbr.rel (0) target = $region25
    $region24: #{tpu_custom_call.1} parent=1 // pred_region
      %55 = dma.done [#allocation6], 2048
    $region25: #{tpu_custom_call.1} parent=1 // pred_fallthru
      _
    %v56 = vld [vmem:[#allocation2] sm:$0xff]
    %v57 = vld [vmem:[#allocation2 + $0x8] sm:$0xff]
    %v58 = vld [vmem:[#allocation2 + $0x10] sm:$0xff]
    %v59 = vld [vmem:[#allocation2 + $0x18] sm:$0xff]
    %v60 = vld [vmem:[#allocation2 + $0x20] sm:$0xff]
    %v61 = vld [vmem:[#allocation2 + $0x28] sm:$0xff]
    %v62 = vld [vmem:[#allocation2 + $0x30] sm:$0xff]
    %v63 = vld [vmem:[#allocation2 + $0x38] sm:$0xff]
    %v64 = vld [vmem:[#allocation2 + $0x40] sm:$0xff]
    %v65 = vld [vmem:[#allocation2 + $0x48] sm:$0xff]
    %v66 = vld [vmem:[#allocation2 + $0x50] sm:$0xff]
    %v67 = vld [vmem:[#allocation2 + $0x58] sm:$0xff]
    %v68 = vld [vmem:[#allocation2 + $0x60] sm:$0xff]
    %v69 = vld [vmem:[#allocation2 + $0x68] sm:$0xff]
    %v70 = vld [vmem:[#allocation2 + $0x70] sm:$0xff]
    %v71 = vld [vmem:[#allocation2 + $0x78] sm:$0xff]
    %v72 = vld [vmem:[#allocation5] sm:$0xff]
    %v73 = vld [vmem:[#allocation5 + $0x8] sm:$0xff]
    %v74 = vld [vmem:[#allocation5 + $0x10] sm:$0xff]
    %v75 = vld [vmem:[#allocation5 + $0x18] sm:$0xff]
    %v76 = vld [vmem:[#allocation5 + $0x20] sm:$0xff]
    %v77 = vld [vmem:[#allocation5 + $0x28] sm:$0xff]
    %v78 = vld [vmem:[#allocation5 + $0x30] sm:$0xff]
    %v79 = vld [vmem:[#allocation5 + $0x38] sm:$0xff]
    %v80 = vld [vmem:[#allocation5 + $0x40] sm:$0xff]
    %v81 = vld [vmem:[#allocation5 + $0x48] sm:$0xff]
    %v82 = vld [vmem:[#allocation5 + $0x50] sm:$0xff]
    %v83 = vld [vmem:[#allocation5 + $0x58] sm:$0xff]
    %v84 = vld [vmem:[#allocation5 + $0x60] sm:$0xff]
    %v85 = vld [vmem:[#allocation5 + $0x68] sm:$0xff]
    %v86 = vld [vmem:[#allocation5 + $0x70] sm:$0xff]
    %v87 = vld [vmem:[#allocation5 + $0x78] sm:$0xff]
    %v88 = vld [vmem:[#allocation7] sm:$0xff]
    %v89 = vld [vmem:[#allocation7 + $0x8] sm:$0xff]
    %v90 = vld [vmem:[#allocation7 + $0x10] sm:$0xff]
    %v91 = vld [vmem:[#allocation7 + $0x18] sm:$0xff]
    %v92 = vld [vmem:[#allocation7 + $0x20] sm:$0xff]
    %v93 = vld [vmem:[#allocation7 + $0x28] sm:$0xff]
    %v94 = vld [vmem:[#allocation7 + $0x30] sm:$0xff]
    %v95 = vld [vmem:[#allocation7 + $0x38] sm:$0xff]
    %v96 = vld [vmem:[#allocation7 + $0x40] sm:$0xff]
    %v97 = vld [vmem:[#allocation7 + $0x48] sm:$0xff]
    %v98 = vld [vmem:[#allocation7 + $0x50] sm:$0xff]
    %v99 = vld [vmem:[#allocation7 + $0x58] sm:$0xff]
    %v100 = vld [vmem:[#allocation7 + $0x60] sm:$0xff]
    %v101 = vld [vmem:[#allocation7 + $0x68] sm:$0xff]
    %v102 = vld [vmem:[#allocation7 + $0x70] sm:$0xff]
    %v103 = vld [vmem:[#allocation7 + $0x78] sm:$0xff]
    %vm104 = vcmask 261120
    %v106 = vsel %vm104, %v72, 0
    %v109 = vsel %vm104, %v73, 0
    %v112 = vsel %vm104, %v80, 0
    %v115 = vsel %vm104, %v81, 0
    %117 = vmatprep.subr.mxu0 0.0
    %118 = vmatpush1.msra.mxu0 %v88
    %119 = vmatprep.subr.mxu0 0.0
    %120 = vmatpush1.msra.mxu0 %v89
    %121 = vmatprep.subr.mxu0 0.0
    %122 = vmatpush1.msra.mxu0 %v90
    %123 = vmatprep.subr.mxu0 0.0
    %124 = vmatpush1.msra.mxu0 %v91
    %125 = vmatprep.subr.mxu0 0.0
    %126 = vmatpush1.msra.mxu0 0.0
    %127 = vmatprep.subr.mxu0 0.0
    %128 = vmatpush1.msra.mxu0 0.0
    %129 = vmatprep.subr.mxu0 0.0
    %130 = vmatpush1.msra.mxu0 0.0
    %131 = vmatprep.subr.mxu0 0.0
    %132 = vmatpush1.msra.mxu0 0.0
    %133 = vmatprep.subr.mxu0 0.0
    %134 = vmatpush1.msra.mxu0 0.0
    %135 = vmatprep.subr.mxu0 0.0
    %136 = vmatpush1.msra.mxu0 0.0
    %137 = vmatprep.subr.mxu0 0.0
    %138 = vmatpush1.msra.mxu0 0.0
    %139 = vmatprep.subr.mxu0 0.0
    %140 = vmatpush1.msra.mxu0 0.0
    %141 = vmatprep.subr.mxu0 0.0
    %142 = vmatpush1.msra.mxu0 0.0
    %143 = vmatprep.subr.mxu0 0.0
    %144 = vmatpush1.msra.mxu0 0.0
    %145 = vmatprep.subr.mxu0 0.0
    %146 = vmatpush1.msra.mxu0 0.0
    %147 = vmatprep.subr.mxu0 0.0
    %148 = vmatpush1.msra.mxu0 0.0
    %149 = vmatprep.subr.mxu0 0.0
    %150 = vmatpush1.msra.mxu0 0.0
    %151 = vmatprep.subr.mxu0 0.0
    %152 = vmatpush1.msra.mxu0 0.0
    %153 = vmatprep.subr.mxu0 0.0
    %154 = vmatpush1.msra.mxu0 0.0
    %155 = vmatprep.subr.mxu0 0.0
    %156 = vmatpush1.msra.mxu0 0.0
    %157 = vmatprep.subr.mxu0 0.0
    %158 = vmatpush1.msra.mxu0 0.0
    %159 = vmatprep.subr.mxu0 0.0
    %160 = vmatpush1.msra.mxu0 0.0
    %161 = vmatprep.subr.mxu0 0.0
    %162 = vmatpush1.msra.mxu0 0.0
    %163 = vmatprep.subr.mxu0 0.0
    %164 = vmatpush1.msra.mxu0 0.0
    %165 = vmatprep.subr.mxu0 0.0
    %166 = vmatpush1.msra.mxu0 0.0
    %167 = vmatprep.subr.mxu0 0.0
    %168 = vmatpush1.msra.mxu0 0.0
    %169 = vmatprep.subr.mxu0 0.0
    %170 = vmatpush1.msra.mxu0 0.0
    %171 = vmatprep.subr.mxu0 0.0
    %172 = vmatpush1.msra.mxu0 0.0
    %173 = vmatprep.subr.mxu0 0.0
    %174 = vmatpush1.msra.mxu0 0.0
    %175 = vmatprep.subr.mxu0 0.0
    %176 = vmatpush1.msra.mxu0 0.0
    %177 = vmatprep.subr.mxu0 0.0
    %178 = vmatpush1.msra.mxu0 0.0
    %179 = vmatprep.subr.mxu0 0.0
    %180 = vmatpush1.msra.mxu0 0.0
    %181 = vmatprep.mubr.f32.mxu0 0.0
    %182 = vmatmul.mubr.f32.gmra.mrb[0].mxu0 %v106
    %v183 = vpop.f32.mrb[0].mxu0
    %v184 = vadd.f32 0.0, %v183
    %v185 = vpop.f32.mrb[0].mxu0
    %186 = vmatprep.mubr.f32.mxu0 0.0
    %187 = vmatmul.mubr.f32.gmra.mrb[0].mxu0 %v109
    %v188 = vpop.f32.mrb[0].mxu0
    %v189 = vadd.f32 0.0, %v188
    %v190 = vpop.f32.mrb[0].mxu0
    %191 = vmatprep.mubr.f32.mxu0 0.0
    %192 = vmatmul.mubr.f32.gmra.mrb[0].mxu0 %v112
    %v193 = vpop.f32.mrb[0].mxu0
    %v194 = vadd.f32 0.0, %v193
    %v195 = vpop.f32.mrb[0].mxu0
    %196 = vmatprep.mubr.f32.mxu0 0.0
    %197 = vmatmul.mubr.f32.gmra.mrb[0].mxu0 %v115
    %v198 = vpop.f32.mrb[0].mxu0
    %v199 = vadd.f32 0.0, %v198
    %v200 = vpop.f32.mrb[0].mxu0
    %201 = vdwg.mxu0
    %vm202 = vcmask 130048
    %v204 = vsel %vm202, %v56, 0
    %v207 = vsel %vm202, %v57, 0
    %209 = vmatprep.subr.mxu0 0.0
    %210 = vmatpush1.msra.mxu0 %v184
    %211 = vmatprep.subr.mxu0 0.0
    %212 = vmatpush1.msra.mxu0 %v189
    %213 = vmatprep.subr.mxu0 0.0
    %214 = vmatpush1.msra.mxu0 0.0
    %215 = vmatprep.subr.mxu0 0.0
    %216 = vmatpush1.msra.mxu0 0.0
    %217 = vmatprep.subr.mxu0 0.0
    %218 = vmatpush1.msra.mxu0 0.0
    %219 = vmatprep.subr.mxu0 0.0
    %220 = vmatpush1.msra.mxu0 0.0
    %221 = vmatprep.subr.mxu0 0.0
    %222 = vmatpush1.msra.mxu0 0.0
    %223 = vmatprep.subr.mxu0 0.0
    %224 = vmatpush1.msra.mxu0 0.0
    %225 = vmatprep.subr.mxu0 0.0
    %226 = vmatpush1.msra.mxu0 0.0
    %227 = vmatprep.subr.mxu0 0.0
    %228 = vmatpush1.msra.mxu0 0.0
    %229 = vmatprep.subr.mxu0 0.0
    %230 = vmatpush1.msra.mxu0 0.0
    %231 = vmatprep.subr.mxu0 0.0
    %232 = vmatpush1.msra.mxu0 0.0
    %233 = vmatprep.subr.mxu0 0.0
    %234 = vmatpush1.msra.mxu0 0.0
    %235 = vmatprep.subr.mxu0 0.0
    %236 = vmatpush1.msra.mxu0 0.0
    %237 = vmatprep.subr.mxu0 0.0
    %238 = vmatpush1.msra.mxu0 0.0
    %239 = vmatprep.subr.mxu0 0.0
    %240 = vmatpush1.msra.mxu0 0.0
    %241 = vmatprep.subr.mxu0 0.0
    %242 = vmatpush1.msra.mxu0 0.0
    %243 = vmatprep.subr.mxu0 0.0
    %244 = vmatpush1.msra.mxu0 0.0
    %245 = vmatprep.subr.mxu0 0.0
    %246 = vmatpush1.msra.mxu0 0.0
    %247 = vmatprep.subr.mxu0 0.0
    %248 = vmatpush1.msra.mxu0 0.0
    %249 = vmatprep.subr.mxu0 0.0
    %250 = vmatpush1.msra.mxu0 0.0
    %251 = vmatprep.subr.mxu0 0.0
    %252 = vmatpush1.msra.mxu0 0.0
    %253 = vmatprep.subr.mxu0 0.0
    %254 = vmatpush1.msra.mxu0 0.0
    %255 = vmatprep.subr.mxu0 0.0
    %256 = vmatpush1.msra.mxu0 0.0
    %257 = vmatprep.subr.mxu0 0.0
    %258 = vmatpush1.msra.mxu0 0.0
    %259 = vmatprep.subr.mxu0 0.0
    %260 = vmatpush1.msra.mxu0 0.0
    %261 = vmatprep.subr.mxu0 0.0
    %262 = vmatpush1.msra.mxu0 0.0
    %263 = vmatprep.subr.mxu0 0.0
    %264 = vmatpush1.msra.mxu0 0.0
    %265 = vmatprep.subr.mxu0 0.0
    %266 = vmatpush1.msra.mxu0 0.0
    %267 = vmatprep.subr.mxu0 0.0
    %268 = vmatpush1.msra.mxu0 0.0
    %269 = vmatprep.subr.mxu0 0.0
    %270 = vmatpush1.msra.mxu0 0.0
    %271 = vmatprep.subr.mxu0 0.0
    %272 = vmatpush1.msra.mxu0 0.0
    %273 = vmatprep.mubr.f32.mxu0 0.0
    %274 = vmatmul.mubr.f32.gmra.mrb[0].mxu0 %v204
    %v275 = vpop.f32.mrb[0].mxu0
    %v276 = vadd.f32 0.0, %v275
    %v277 = vpop.f32.mrb[0].mxu0
    %278 = vmatprep.mubr.f32.mxu0 0.0
    %279 = vmatmul.mubr.f32.gmra.mrb[0].mxu0 %v207
    %v280 = vpop.f32.mrb[0].mxu0
    %v281 = vadd.f32 0.0, %v280
    %v282 = vpop.f32.mrb[0].mxu0
    %283 = vdwg.mxu0
    %v285 = vsel %vm202, %v64, 0
    %v288 = vsel %vm202, %v65, 0
    %290 = vmatprep.subr.mxu0 0.0
    %291 = vmatpush1.msra.mxu0 %v194
    %292 = vmatprep.subr.mxu0 0.0
    %293 = vmatpush1.msra.mxu0 %v199
    %294 = vmatprep.subr.mxu0 0.0
    %295 = vmatpush1.msra.mxu0 0.0
    %296 = vmatprep.subr.mxu0 0.0
    %297 = vmatpush1.msra.mxu0 0.0
    %298 = vmatprep.subr.mxu0 0.0
    %299 = vmatpush1.msra.mxu0 0.0
    %300 = vmatprep.subr.mxu0 0.0
    %301 = vmatpush1.msra.mxu0 0.0
    %302 = vmatprep.subr.mxu0 0.0
    %303 = vmatpush1.msra.mxu0 0.0
    %304 = vmatprep.subr.mxu0 0.0
    %305 = vmatpush1.msra.mxu0 0.0
    %306 = vmatprep.subr.mxu0 0.0
    %307 = vmatpush1.msra.mxu0 0.0
    %308 = vmatprep.subr.mxu0 0.0
    %309 = vmatpush1.msra.mxu0 0.0
    %310 = vmatprep.subr.mxu0 0.0
    %311 = vmatpush1.msra.mxu0 0.0
    %312 = vmatprep.subr.mxu0 0.0
    %313 = vmatpush1.msra.mxu0 0.0
    %314 = vmatprep.subr.mxu0 0.0
    %315 = vmatpush1.msra.mxu0 0.0
    %316 = vmatprep.subr.mxu0 0.0
    %317 = vmatpush1.msra.mxu0 0.0
    %318 = vmatprep.subr.mxu0 0.0
    %319 = vmatpush1.msra.mxu0 0.0
    %320 = vmatprep.subr.mxu0 0.0
    %321 = vmatpush1.msra.mxu0 0.0
    %322 = vmatprep.subr.mxu0 0.0
    %323 = vmatpush1.msra.mxu0 0.0
    %324 = vmatprep.subr.mxu0 0.0
    %325 = vmatpush1.msra.mxu0 0.0
    %326 = vmatprep.subr.mxu0 0.0
    %327 = vmatpush1.msra.mxu0 0.0
    %328 = vmatprep.subr.mxu0 0.0
    %329 = vmatpush1.msra.mxu0 0.0
    %330 = vmatprep.subr.mxu0 0.0
    %331 = vmatpush1.msra.mxu0 0.0
    %332 = vmatprep.subr.mxu0 0.0
    %333 = vmatpush1.msra.mxu0 0.0
    %334 = vmatprep.subr.mxu0 0.0
    %335 = vmatpush1.msra.mxu0 0.0
    %336 = vmatprep.subr.mxu0 0.0
    %337 = vmatpush1.msra.mxu0 0.0
    %338 = vmatprep.subr.mxu0 0.0
    %339 = vmatpush1.msra.mxu0 0.0
    %340 = vmatprep.subr.mxu0 0.0
    %341 = vmatpush1.msra.mxu0 0.0
    %342 = vmatprep.subr.mxu0 0.0
    %343 = vmatpush1.msra.mxu0 0.0
    %344 = vmatprep.subr.mxu0 0.0
    %345 = vmatpush1.msra.mxu0 0.0
    %346 = vmatprep.subr.mxu0 0.0
    %347 = vmatpush1.msra.mxu0 0.0
    %348 = vmatprep.subr.mxu0 0.0
    %349 = vmatpush1.msra.mxu0 0.0
    %350 = vmatprep.subr.mxu0 0.0
    %351 = vmatpush1.msra.mxu0 0.0
    %352 = vmatprep.subr.mxu0 0.0
    %353 = vmatpush1.msra.mxu0 0.0
    %354 = vmatprep.mubr.f32.mxu0 0.0
    %355 = vmatmul.mubr.f32.gmra.mrb[0].mxu0 %v285
    %v356 = vpop.f32.mrb[0].mxu0
    %v357 = vadd.f32 0.0, %v356
    %v358 = vpop.f32.mrb[0].mxu0
    %359 = vmatprep.mubr.f32.mxu0 0.0
    %360 = vmatmul.mubr.f32.gmra.mrb[0].mxu0 %v288
    %v361 = vpop.f32.mrb[0].mxu0
    %v362 = vadd.f32 0.0, %v361
    %v363 = vpop.f32.mrb[0].mxu0
    %364 = vdwg.mxu0
    %365 = vst.msk [vmem:[#allocation8] sm:$0xff] %vm104, %v276
    %366 = vst.msk [vmem:[#allocation8 + $0x8] sm:$0xff] %vm104, %v281
    %367 = vst.msk [vmem:[#allocation8 + $0x40] sm:$0xff] %vm104, %v357
    %368 = vst.msk [vmem:[#allocation8 + $0x48] sm:$0xff] %vm104, %v362
    %v370 = vsel %vm104, %v74, 0
    %v373 = vsel %vm104, %v75, 0
    %v376 = vsel %vm104, %v82, 0
    %v379 = vsel %vm104, %v83, 0
    %381 = vmatprep.subr.mxu0 0.0
    %382 = vmatpush1.msra.mxu0 %v92
    %383 = vmatprep.subr.mxu0 0.0
    %384 = vmatpush1.msra.mxu0 %v93
    %385 = vmatprep.subr.mxu0 0.0
    %386 = vmatpush1.msra.mxu0 %v94
    %387 = vmatprep.subr.mxu0 0.0
    %388 = vmatpush1.msra.mxu0 %v95
    %389 = vmatprep.subr.mxu0 0.0
    %390 = vmatpush1.msra.mxu0 0.0
    %391 = vmatprep.subr.mxu0 0.0
    %392 = vmatpush1.msra.mxu0 0.0
    %393 = vmatprep.subr.mxu0 0.0
    %394 = vmatpush1.msra.mxu0 0.0
    %395 = vmatprep.subr.mxu0 0.0
    %396 = vmatpush1.msra.mxu0 0.0
    %397 = vmatprep.subr.mxu0 0.0
    %398 = vmatpush1.msra.mxu0 0.0
    %399 = vmatprep.subr.mxu0 0.0
    %400 = vmatpush1.msra.mxu0 0.0
    %401 = vmatprep.subr.mxu0 0.0
    %402 = vmatpush1.msra.mxu0 0.0
    %403 = vmatprep.subr.mxu0 0.0
    %404 = vmatpush1.msra.mxu0 0.0
    %405 = vmatprep.subr.mxu0 0.0
    %406 = vmatpush1.msra.mxu0 0.0
    %407 = vmatprep.subr.mxu0 0.0
    %408 = vmatpush1.msra.mxu0 0.0
    %409 = vmatprep.subr.mxu0 0.0
    %410 = vmatpush1.msra.mxu0 0.0
    %411 = vmatprep.subr.mxu0 0.0
    %412 = vmatpush1.msra.mxu0 0.0
    %413 = vmatprep.subr.mxu0 0.0
    %414 = vmatpush1.msra.mxu0 0.0
    %415 = vmatprep.subr.mxu0 0.0
    %416 = vmatpush1.msra.mxu0 0.0
    %417 = vmatprep.subr.mxu0 0.0
    %418 = vmatpush1.msra.mxu0 0.0
    %419 = vmatprep.subr.mxu0 0.0
    %420 = vmatpush1.msra.mxu0 0.0
    %421 = vmatprep.subr.mxu0 0.0
    %422 = vmatpush1.msra.mxu0 0.0
    %423 = vmatprep.subr.mxu0 0.0
    %424 = vmatpush1.msra.mxu0 0.0
    %425 = vmatprep.subr.mxu0 0.0
    %426 = vmatpush1.msra.mxu0 0.0
    %427 = vmatprep.subr.mxu0 0.0
    %428 = vmatpush1.msra.mxu0 0.0
    %429 = vmatprep.subr.mxu0 0.0
    %430 = vmatpush1.msra.mxu0 0.0
    %431 = vmatprep.subr.mxu0 0.0
    %432 = vmatpush1.msra.mxu0 0.0
    %433 = vmatprep.subr.mxu0 0.0
    %434 = vmatpush1.msra.mxu0 0.0
    %435 = vmatprep.subr.mxu0 0.0
    %436 = vmatpush1.msra.mxu0 0.0
    %437 = vmatprep.subr.mxu0 0.0
    %438 = vmatpush1.msra.mxu0 0.0
    %439 = vmatprep.subr.mxu0 0.0
    %440 = vmatpush1.msra.mxu0 0.0
    %441 = vmatprep.subr.mxu0 0.0
    %442 = vmatpush1.msra.mxu0 0.0
    %443 = vmatprep.subr.mxu0 0.0
    %444 = vmatpush1.msra.mxu0 0.0
    %445 = vmatprep.mubr.f32.mxu0 0.0
    %446 = vmatmul.mubr.f32.gmra.mrb[0].mxu0 %v370
    %v447 = vpop.f32.mrb[0].mxu0
    %v448 = vadd.f32 0.0, %v447
    %v449 = vpop.f32.mrb[0].mxu0
    %450 = vmatprep.mubr.f32.mxu0 0.0
    %451 = vmatmul.mubr.f32.gmra.mrb[0].mxu0 %v373
    %v452 = vpop.f32.mrb[0].mxu0
    %v453 = vadd.f32 0.0, %v452
    %v454 = vpop.f32.mrb[0].mxu0
    %455 = vmatprep.mubr.f32.mxu0 0.0
    %456 = vmatmul.mubr.f32.gmra.mrb[0].mxu0 %v376
    %v457 = vpop.f32.mrb[0].mxu0
    %v458 = vadd.f32 0.0, %v457
    %v459 = vpop.f32.mrb[0].mxu0
    %460 = vmatprep.mubr.f32.mxu0 0.0
    %461 = vmatmul.mubr.f32.gmra.mrb[0].mxu0 %v379
    %v462 = vpop.f32.mrb[0].mxu0
    %v463 = vadd.f32 0.0, %v462
    %v464 = vpop.f32.mrb[0].mxu0
    %465 = vdwg.mxu0
    %v467 = vsel %vm202, %v58, 0
    %v470 = vsel %vm202, %v59, 0
    %472 = vmatprep.subr.mxu0 0.0
    %473 = vmatpush1.msra.mxu0 %v448
    %474 = vmatprep.subr.mxu0 0.0
    %475 = vmatpush1.msra.mxu0 %v453
    %476 = vmatprep.subr.mxu0 0.0
    %477 = vmatpush1.msra.mxu0 0.0
    %478 = vmatprep.subr.mxu0 0.0
    %479 = vmatpush1.msra.mxu0 0.0
    %480 = vmatprep.subr.mxu0 0.0
    %481 = vmatpush1.msra.mxu0 0.0
    %482 = vmatprep.subr.mxu0 0.0
    %483 = vmatpush1.msra.mxu0 0.0
    %484 = vmatprep.subr.mxu0 0.0
    %485 = vmatpush1.msra.mxu0 0.0
    %486 = vmatprep.subr.mxu0 0.0
    %487 = vmatpush1.msra.mxu0 0.0
    %488 = vmatprep.subr.mxu0 0.0
    %489 = vmatpush1.msra.mxu0 0.0
    %490 = vmatprep.subr.mxu0 0.0
    %491 = vmatpush1.msra.mxu0 0.0
    %492 = vmatprep.subr.mxu0 0.0
    %493 = vmatpush1.msra.mxu0 0.0
    %494 = vmatprep.subr.mxu0 0.0
    %495 = vmatpush1.msra.mxu0 0.0
    %496 = vmatprep.subr.mxu0 0.0
    %497 = vmatpush1.msra.mxu0 0.0
    %498 = vmatprep.subr.mxu0 0.0
    %499 = vmatpush1.msra.mxu0 0.0
    %500 = vmatprep.subr.mxu0 0.0
    %501 = vmatpush1.msra.mxu0 0.0
    %502 = vmatprep.subr.mxu0 0.0
    %503 = vmatpush1.msra.mxu0 0.0
    %504 = vmatprep.subr.mxu0 0.0
    %505 = vmatpush1.msra.mxu0 0.0
    %506 = vmatprep.subr.mxu0 0.0
    %507 = vmatpush1.msra.mxu0 0.0
    %508 = vmatprep.subr.mxu0 0.0
    %509 = vmatpush1.msra.mxu0 0.0
    %510 = vmatprep.subr.mxu0 0.0
    %511 = vmatpush1.msra.mxu0 0.0
    %512 = vmatprep.subr.mxu0 0.0
    %513 = vmatpush1.msra.mxu0 0.0
    %514 = vmatprep.subr.mxu0 0.0
    %515 = vmatpush1.msra.mxu0 0.0
    %516 = vmatprep.subr.mxu0 0.0
    %517 = vmatpush1.msra.mxu0 0.0
    %518 = vmatprep.subr.mxu0 0.0
    %519 = vmatpush1.msra.mxu0 0.0
    %520 = vmatprep.subr.mxu0 0.0
    %521 = vmatpush1.msra.mxu0 0.0
    %522 = vmatprep.subr.mxu0 0.0
    %523 = vmatpush1.msra.mxu0 0.0
    %524 = vmatprep.subr.mxu0 0.0
    %525 = vmatpush1.msra.mxu0 0.0
    %526 = vmatprep.subr.mxu0 0.0
    %527 = vmatpush1.msra.mxu0 0.0
    %528 = vmatprep.subr.mxu0 0.0
    %529 = vmatpush1.msra.mxu0 0.0
    %530 = vmatprep.subr.mxu0 0.0
    %531 = vmatpush1.msra.mxu0 0.0
    %532 = vmatprep.subr.mxu0 0.0
    %533 = vmatpush1.msra.mxu0 0.0
    %534 = vmatprep.subr.mxu0 0.0
    %535 = vmatpush1.msra.mxu0 0.0
    %536 = vmatprep.mubr.f32.mxu0 0.0
    %537 = vmatmul.mubr.f32.gmra.mrb[0].mxu0 %v467
    %v538 = vpop.f32.mrb[0].mxu0
    %v539 = vadd.f32 0.0, %v538
    %v540 = vpop.f32.mrb[0].mxu0
    %541 = vmatprep.mubr.f32.mxu0 0.0
    %542 = vmatmul.mubr.f32.gmra.mrb[0].mxu0 %v470
    %v543 = vpop.f32.mrb[0].mxu0
    %v544 = vadd.f32 0.0, %v543
    %v545 = vpop.f32.mrb[0].mxu0
    %546 = vdwg.mxu0
    %v548 = vsel %vm202, %v66, 0
    %v551 = vsel %vm202, %v67, 0
    %553 = vmatprep.subr.mxu0 0.0
    %554 = vmatpush1.msra.mxu0 %v458
    %555 = vmatprep.subr.mxu0 0.0
    %556 = vmatpush1.msra.mxu0 %v463
    %557 = vmatprep.subr.mxu0 0.0
    %558 = vmatpush1.msra.mxu0 0.0
    %559 = vmatprep.subr.mxu0 0.0
    %560 = vmatpush1.msra.mxu0 0.0
    %561 = vmatprep.subr.mxu0 0.0
    %562 = vmatpush1.msra.mxu0 0.0
    %563 = vmatprep.subr.mxu0 0.0
    %564 = vmatpush1.msra.mxu0 0.0
    %565 = vmatprep.subr.mxu0 0.0
    %566 = vmatpush1.msra.mxu0 0.0
    %567 = vmatprep.subr.mxu0 0.0
    %568 = vmatpush1.msra.mxu0 0.0
    %569 = vmatprep.subr.mxu0 0.0
    %570 = vmatpush1.msra.mxu0 0.0
    %571 = vmatprep.subr.mxu0 0.0
    %572 = vmatpush1.msra.mxu0 0.0
    %573 = vmatprep.subr.mxu0 0.0
    %574 = vmatpush1.msra.mxu0 0.0
    %575 = vmatprep.subr.mxu0 0.0
    %576 = vmatpush1.msra.mxu0 0.0
    %577 = vmatprep.subr.mxu0 0.0
    %578 = vmatpush1.msra.mxu0 0.0
    %579 = vmatprep.subr.mxu0 0.0
    %580 = vmatpush1.msra.mxu0 0.0
    %581 = vmatprep.subr.mxu0 0.0
    %582 = vmatpush1.msra.mxu0 0.0
    %583 = vmatprep.subr.mxu0 0.0
    %584 = vmatpush1.msra.mxu0 0.0
    %585 = vmatprep.subr.mxu0 0.0
    %586 = vmatpush1.msra.mxu0 0.0
    %587 = vmatprep.subr.mxu0 0.0
    %588 = vmatpush1.msra.mxu0 0.0
    %589 = vmatprep.subr.mxu0 0.0
    %590 = vmatpush1.msra.mxu0 0.0
    %591 = vmatprep.subr.mxu0 0.0
    %592 = vmatpush1.msra.mxu0 0.0
    %593 = vmatprep.subr.mxu0 0.0
    %594 = vmatpush1.msra.mxu0 0.0
    %595 = vmatprep.subr.mxu0 0.0
    %596 = vmatpush1.msra.mxu0 0.0
    %597 = vmatprep.subr.mxu0 0.0
    %598 = vmatpush1.msra.mxu0 0.0
    %599 = vmatprep.subr.mxu0 0.0
    %600 = vmatpush1.msra.mxu0 0.0
    %601 = vmatprep.subr.mxu0 0.0
    %602 = vmatpush1.msra.mxu0 0.0
    %603 = vmatprep.subr.mxu0 0.0
    %604 = vmatpush1.msra.mxu0 0.0
    %605 = vmatprep.subr.mxu0 0.0
    %606 = vmatpush1.msra.mxu0 0.0
    %607 = vmatprep.subr.mxu0 0.0
    %608 = vmatpush1.msra.mxu0 0.0
    %609 = vmatprep.subr.mxu0 0.0
    %610 = vmatpush1.msra.mxu0 0.0
    %611 = vmatprep.subr.mxu0 0.0
    %612 = vmatpush1.msra.mxu0 0.0
    %613 = vmatprep.subr.mxu0 0.0
    %614 = vmatpush1.msra.mxu0 0.0
    %615 = vmatprep.subr.mxu0 0.0
    %616 = vmatpush1.msra.mxu0 0.0
    %617 = vmatprep.mubr.f32.mxu0 0.0
    %618 = vmatmul.mubr.f32.gmra.mrb[0].mxu0 %v548
    %v619 = vpop.f32.mrb[0].mxu0
    %v620 = vadd.f32 0.0, %v619
    %v621 = vpop.f32.mrb[0].mxu0
    %622 = vmatprep.mubr.f32.mxu0 0.0
    %623 = vmatmul.mubr.f32.gmra.mrb[0].mxu0 %v551
    %v624 = vpop.f32.mrb[0].mxu0
    %v625 = vadd.f32 0.0, %v624
    %v626 = vpop.f32.mrb[0].mxu0
    %627 = vdwg.mxu0
    %s628 = scalar_lea.vmem [#allocation8], 16
    %629 = vst.msk [vmem:[%s628] sm:$0xff] %vm104, %v539
    %630 = vst.msk [vmem:[%s628 + $0x8] sm:$0xff] %vm104, %v544
    %631 = vst.msk [vmem:[%s628 + $0x40] sm:$0xff] %vm104, %v620
    %632 = vst.msk [vmem:[%s628 + $0x48] sm:$0xff] %vm104, %v625
    %v634 = vsel %vm104, %v76, 0
    %v637 = vsel %vm104, %v77, 0
    %v640 = vsel %vm104, %v84, 0
    %v643 = vsel %vm104, %v85, 0
    %645 = vmatprep.subr.mxu0 0.0
    %646 = vmatpush1.msra.mxu0 %v96
    %647 = vmatprep.subr.mxu0 0.0
    %648 = vmatpush1.msra.mxu0 %v97
    %649 = vmatprep.subr.mxu0 0.0
    %650 = vmatpush1.msra.mxu0 %v98
    %651 = vmatprep.subr.mxu0 0.0
    %652 = vmatpush1.msra.mxu0 %v99
    %653 = vmatprep.subr.mxu0 0.0
    %654 = vmatpush1.msra.mxu0 0.0
    %655 = vmatprep.subr.mxu0 0.0
    %656 = vmatpush1.msra.mxu0 0.0
    %657 = vmatprep.subr.mxu0 0.0
    %658 = vmatpush1.msra.mxu0 0.0
    %659 = vmatprep.subr.mxu0 0.0
    %660 = vmatpush1.msra.mxu0 0.0
    %661 = vmatprep.subr.mxu0 0.0
    %662 = vmatpush1.msra.mxu0 0.0
    %663 = vmatprep.subr.mxu0 0.0
    %664 = vmatpush1.msra.mxu0 0.0
    %665 = vmatprep.subr.mxu0 0.0
    %666 = vmatpush1.msra.mxu0 0.0
    %667 = vmatprep.subr.mxu0 0.0
    %668 = vmatpush1.msra.mxu0 0.0
    %669 = vmatprep.subr.mxu0 0.0
    %670 = vmatpush1.msra.mxu0 0.0
    %671 = vmatprep.subr.mxu0 0.0
    %672 = vmatpush1.msra.mxu0 0.0
    %673 = vmatprep.subr.mxu0 0.0
    %674 = vmatpush1.msra.mxu0 0.0
    %675 = vmatprep.subr.mxu0 0.0
    %676 = vmatpush1.msra.mxu0 0.0
    %677 = vmatprep.subr.mxu0 0.0
    %678 = vmatpush1.msra.mxu0 0.0
    %679 = vmatprep.subr.mxu0 0.0
    %680 = vmatpush1.msra.mxu0 0.0
    %681 = vmatprep.subr.mxu0 0.0
    %682 = vmatpush1.msra.mxu0 0.0
    %683 = vmatprep.subr.mxu0 0.0
    %684 = vmatpush1.msra.mxu0 0.0
    %685 = vmatprep.subr.mxu0 0.0
    %686 = vmatpush1.msra.mxu0 0.0
    %687 = vmatprep.subr.mxu0 0.0
    %688 = vmatpush1.msra.mxu0 0.0
    %689 = vmatprep.subr.mxu0 0.0
    %690 = vmatpush1.msra.mxu0 0.0
    %691 = vmatprep.subr.mxu0 0.0
    %692 = vmatpush1.msra.mxu0 0.0
    %693 = vmatprep.subr.mxu0 0.0
    %694 = vmatpush1.msra.mxu0 0.0
    %695 = vmatprep.subr.mxu0 0.0
    %696 = vmatpush1.msra.mxu0 0.0
    %697 = vmatprep.subr.mxu0 0.0
    %698 = vmatpush1.msra.mxu0 0.0
    %699 = vmatprep.subr.mxu0 0.0
    %700 = vmatpush1.msra.mxu0 0.0
    %701 = vmatprep.subr.mxu0 0.0
    %702 = vmatpush1.msra.mxu0 0.0
    %703 = vmatprep.subr.mxu0 0.0
    %704 = vmatpush1.msra.mxu0 0.0
    %705 = vmatprep.subr.mxu0 0.0
    %706 = vmatpush1.msra.mxu0 0.0
    %707 = vmatprep.subr.mxu0 0.0
    %708 = vmatpush1.msra.mxu0 0.0
    %709 = vmatprep.mubr.f32.mxu0 0.0
    %710 = vmatmul.mubr.f32.gmra.mrb[0].mxu0 %v634
    %v711 = vpop.f32.mrb[0].mxu0
    %v712 = vadd.f32 0.0, %v711
    %v713 = vpop.f32.mrb[0].mxu0
    %714 = vmatprep.mubr.f32.mxu0 0.0
    %715 = vmatmul.mubr.f32.gmra.mrb[0].mxu0 %v637
    %v716 = vpop.f32.mrb[0].mxu0
    %v717 = vadd.f32 0.0, %v716
    %v718 = vpop.f32.mrb[0].mxu0
    %719 = vmatprep.mubr.f32.mxu0 0.0
    %720 = vmatmul.mubr.f32.gmra.mrb[0].mxu0 %v640
    %v721 = vpop.f32.mrb[0].mxu0
    %v722 = vadd.f32 0.0, %v721
    %v723 = vpop.f32.mrb[0].mxu0
    %724 = vmatprep.mubr.f32.mxu0 0.0
    %725 = vmatmul.mubr.f32.gmra.mrb[0].mxu0 %v643
    %v726 = vpop.f32.mrb[0].mxu0
    %v727 = vadd.f32 0.0, %v726
    %v728 = vpop.f32.mrb[0].mxu0
    %729 = vdwg.mxu0
    %v731 = vsel %vm202, %v60, 0
    %v734 = vsel %vm202, %v61, 0
    %736 = vmatprep.subr.mxu0 0.0
    %737 = vmatpush1.msra.mxu0 %v712
    %738 = vmatprep.subr.mxu0 0.0
    %739 = vmatpush1.msra.mxu0 %v717
    %740 = vmatprep.subr.mxu0 0.0
    %741 = vmatpush1.msra.mxu0 0.0
    %742 = vmatprep.subr.mxu0 0.0
    %743 = vmatpush1.msra.mxu0 0.0
    %744 = vmatprep.subr.mxu0 0.0
    %745 = vmatpush1.msra.mxu0 0.0
    %746 = vmatprep.subr.mxu0 0.0
    %747 = vmatpush1.msra.mxu0 0.0
    %748 = vmatprep.subr.mxu0 0.0
    %749 = vmatpush1.msra.mxu0 0.0
    %750 = vmatprep.subr.mxu0 0.0
    %751 = vmatpush1.msra.mxu0 0.0
    %752 = vmatprep.subr.mxu0 0.0
    %753 = vmatpush1.msra.mxu0 0.0
    %754 = vmatprep.subr.mxu0 0.0
    %755 = vmatpush1.msra.mxu0 0.0
    %756 = vmatprep.subr.mxu0 0.0
    %757 = vmatpush1.msra.mxu0 0.0
    %758 = vmatprep.subr.mxu0 0.0
    %759 = vmatpush1.msra.mxu0 0.0
    %760 = vmatprep.subr.mxu0 0.0
    %761 = vmatpush1.msra.mxu0 0.0
    %762 = vmatprep.subr.mxu0 0.0
    %763 = vmatpush1.msra.mxu0 0.0
    %764 = vmatprep.subr.mxu0 0.0
    %765 = vmatpush1.msra.mxu0 0.0
    %766 = vmatprep.subr.mxu0 0.0
    %767 = vmatpush1.msra.mxu0 0.0
    %768 = vmatprep.subr.mxu0 0.0
    %769 = vmatpush1.msra.mxu0 0.0
    %770 = vmatprep.subr.mxu0 0.0
    %771 = vmatpush1.msra.mxu0 0.0
    %772 = vmatprep.subr.mxu0 0.0
    %773 = vmatpush1.msra.mxu0 0.0
    %774 = vmatprep.subr.mxu0 0.0
    %775 = vmatpush1.msra.mxu0 0.0
    %776 = vmatprep.subr.mxu0 0.0
    %777 = vmatpush1.msra.mxu0 0.0
    %778 = vmatprep.subr.mxu0 0.0
    %779 = vmatpush1.msra.mxu0 0.0
    %780 = vmatprep.subr.mxu0 0.0
    %781 = vmatpush1.msra.mxu0 0.0
    %782 = vmatprep.subr.mxu0 0.0
    %783 = vmatpush1.msra.mxu0 0.0
    %784 = vmatprep.subr.mxu0 0.0
    %785 = vmatpush1.msra.mxu0 0.0
    %786 = vmatprep.subr.mxu0 0.0
    %787 = vmatpush1.msra.mxu0 0.0
    %788 = vmatprep.subr.mxu0 0.0
    %789 = vmatpush1.msra.mxu0 0.0
    %790 = vmatprep.subr.mxu0 0.0
    %791 = vmatpush1.msra.mxu0 0.0
    %792 = vmatprep.subr.mxu0 0.0
    %793 = vmatpush1.msra.mxu0 0.0
    %794 = vmatprep.subr.mxu0 0.0
    %795 = vmatpush1.msra.mxu0 0.0
    %796 = vmatprep.subr.mxu0 0.0
    %797 = vmatpush1.msra.mxu0 0.0
    %798 = vmatprep.subr.mxu0 0.0
    %799 = vmatpush1.msra.mxu0 0.0
    %800 = vmatprep.mubr.f32.mxu0 0.0
    %801 = vmatmul.mubr.f32.gmra.mrb[0].mxu0 %v731
    %v802 = vpop.f32.mrb[0].mxu0
    %v803 = vadd.f32 0.0, %v802
    %v804 = vpop.f32.mrb[0].mxu0
    %805 = vmatprep.mubr.f32.mxu0 0.0
    %806 = vmatmul.mubr.f32.gmra.mrb[0].mxu0 %v734
    %v807 = vpop.f32.mrb[0].mxu0
    %v808 = vadd.f32 0.0, %v807
    %v809 = vpop.f32.mrb[0].mxu0
    %810 = vdwg.mxu0
    %v812 = vsel %vm202, %v68, 0
    %v815 = vsel %vm202, %v69, 0
    %817 = vmatprep.subr.mxu0 0.0
    %818 = vmatpush1.msra.mxu0 %v722
    %819 = vmatprep.subr.mxu0 0.0
    %820 = vmatpush1.msra.mxu0 %v727
    %821 = vmatprep.subr.mxu0 0.0
    %822 = vmatpush1.msra.mxu0 0.0
    %823 = vmatprep.subr.mxu0 0.0
    %824 = vmatpush1.msra.mxu0 0.0
    %825 = vmatprep.subr.mxu0 0.0
    %826 = vmatpush1.msra.mxu0 0.0
    %827 = vmatprep.subr.mxu0 0.0
    %828 = vmatpush1.msra.mxu0 0.0
    %829 = vmatprep.subr.mxu0 0.0
    %830 = vmatpush1.msra.mxu0 0.0
    %831 = vmatprep.subr.mxu0 0.0
    %832 = vmatpush1.msra.mxu0 0.0
    %833 = vmatprep.subr.mxu0 0.0
    %834 = vmatpush1.msra.mxu0 0.0
    %835 = vmatprep.subr.mxu0 0.0
    %836 = vmatpush1.msra.mxu0 0.0
    %837 = vmatprep.subr.mxu0 0.0
    %838 = vmatpush1.msra.mxu0 0.0
    %839 = vmatprep.subr.mxu0 0.0
    %840 = vmatpush1.msra.mxu0 0.0
    %841 = vmatprep.subr.mxu0 0.0
    %842 = vmatpush1.msra.mxu0 0.0
    %843 = vmatprep.subr.mxu0 0.0
    %844 = vmatpush1.msra.mxu0 0.0
    %845 = vmatprep.subr.mxu0 0.0
    %846 = vmatpush1.msra.mxu0 0.0
    %847 = vmatprep.subr.mxu0 0.0
    %848 = vmatpush1.msra.mxu0 0.0
    %849 = vmatprep.subr.mxu0 0.0
    %850 = vmatpush1.msra.mxu0 0.0
    %851 = vmatprep.subr.mxu0 0.0
    %852 = vmatpush1.msra.mxu0 0.0
    %853 = vmatprep.subr.mxu0 0.0
    %854 = vmatpush1.msra.mxu0 0.0
    %855 = vmatprep.subr.mxu0 0.0
    %856 = vmatpush1.msra.mxu0 0.0
    %857 = vmatprep.subr.mxu0 0.0
    %858 = vmatpush1.msra.mxu0 0.0
    %859 = vmatprep.subr.mxu0 0.0
    %860 = vmatpush1.msra.mxu0 0.0
    %861 = vmatprep.subr.mxu0 0.0
    %862 = vmatpush1.msra.mxu0 0.0
    %863 = vmatprep.subr.mxu0 0.0
    %864 = vmatpush1.msra.mxu0 0.0
    %865 = vmatprep.subr.mxu0 0.0
    %866 = vmatpush1.msra.mxu0 0.0
    %867 = vmatprep.subr.mxu0 0.0
    %868 = vmatpush1.msra.mxu0 0.0
    %869 = vmatprep.subr.mxu0 0.0
    %870 = vmatpush1.msra.mxu0 0.0
    %871 = vmatprep.subr.mxu0 0.0
    %872 = vmatpush1.msra.mxu0 0.0
    %873 = vmatprep.subr.mxu0 0.0
    %874 = vmatpush1.msra.mxu0 0.0
    %875 = vmatprep.subr.mxu0 0.0
    %876 = vmatpush1.msra.mxu0 0.0
    %877 = vmatprep.subr.mxu0 0.0
    %878 = vmatpush1.msra.mxu0 0.0
    %879 = vmatprep.subr.mxu0 0.0
    %880 = vmatpush1.msra.mxu0 0.0
    %881 = vmatprep.mubr.f32.mxu0 0.0
    %882 = vmatmul.mubr.f32.gmra.mrb[0].mxu0 %v812
    %v883 = vpop.f32.mrb[0].mxu0
    %v884 = vadd.f32 0.0, %v883
    %v885 = vpop.f32.mrb[0].mxu0
    %886 = vmatprep.mubr.f32.mxu0 0.0
    %887 = vmatmul.mubr.f32.gmra.mrb[0].mxu0 %v815
    %v888 = vpop.f32.mrb[0].mxu0
    %v889 = vadd.f32 0.0, %v888
    %v890 = vpop.f32.mrb[0].mxu0
    %891 = vdwg.mxu0
    %s892 = scalar_lea.vmem [#allocation8], 32
    %893 = vst.msk [vmem:[%s892] sm:$0xff] %vm104, %v803
    %894 = vst.msk [vmem:[%s892 + $0x8] sm:$0xff] %vm104, %v808
    %895 = vst.msk [vmem:[%s892 + $0x40] sm:$0xff] %vm104, %v884
    %896 = vst.msk [vmem:[%s892 + $0x48] sm:$0xff] %vm104, %v889
    %v898 = vsel %vm104, %v78, 0
    %v901 = vsel %vm104, %v79, 0
    %v904 = vsel %vm104, %v86, 0
    %v907 = vsel %vm104, %v87, 0
    %909 = vmatprep.subr.mxu0 0.0
    %910 = vmatpush1.msra.mxu0 %v100
    %911 = vmatprep.subr.mxu0 0.0
    %912 = vmatpush1.msra.mxu0 %v101
    %913 = vmatprep.subr.mxu0 0.0
    %914 = vmatpush1.msra.mxu0 %v102
    %915 = vmatprep.subr.mxu0 0.0
    %916 = vmatpush1.msra.mxu0 %v103
    %917 = vmatprep.subr.mxu0 0.0
    %918 = vmatpush1.msra.mxu0 0.0
    %919 = vmatprep.subr.mxu0 0.0
    %920 = vmatpush1.msra.mxu0 0.0
    %921 = vmatprep.subr.mxu0 0.0
    %922 = vmatpush1.msra.mxu0 0.0
    %923 = vmatprep.subr.mxu0 0.0
    %924 = vmatpush1.msra.mxu0 0.0
    %925 = vmatprep.subr.mxu0 0.0
    %926 = vmatpush1.msra.mxu0 0.0
    %927 = vmatprep.subr.mxu0 0.0
    %928 = vmatpush1.msra.mxu0 0.0
    %929 = vmatprep.subr.mxu0 0.0
    %930 = vmatpush1.msra.mxu0 0.0
    %931 = vmatprep.subr.mxu0 0.0
    %932 = vmatpush1.msra.mxu0 0.0
    %933 = vmatprep.subr.mxu0 0.0
    %934 = vmatpush1.msra.mxu0 0.0
    %935 = vmatprep.subr.mxu0 0.0
    %936 = vmatpush1.msra.mxu0 0.0
    %937 = vmatprep.subr.mxu0 0.0
    %938 = vmatpush1.msra.mxu0 0.0
    %939 = vmatprep.subr.mxu0 0.0
    %940 = vmatpush1.msra.mxu0 0.0
    %941 = vmatprep.subr.mxu0 0.0
    %942 = vmatpush1.msra.mxu0 0.0
    %943 = vmatprep.subr.mxu0 0.0
    %944 = vmatpush1.msra.mxu0 0.0
    %945 = vmatprep.subr.mxu0 0.0
    %946 = vmatpush1.msra.mxu0 0.0
    %947 = vmatprep.subr.mxu0 0.0
    %948 = vmatpush1.msra.mxu0 0.0
    %949 = vmatprep.subr.mxu0 0.0
    %950 = vmatpush1.msra.mxu0 0.0
    %951 = vmatprep.subr.mxu0 0.0
    %952 = vmatpush1.msra.mxu0 0.0
    %953 = vmatprep.subr.mxu0 0.0
    %954 = vmatpush1.msra.mxu0 0.0
    %955 = vmatprep.subr.mxu0 0.0
    %956 = vmatpush1.msra.mxu0 0.0
    %957 = vmatprep.subr.mxu0 0.0
    %958 = vmatpush1.msra.mxu0 0.0
    %959 = vmatprep.subr.mxu0 0.0
    %960 = vmatpush1.msra.mxu0 0.0
    %961 = vmatprep.subr.mxu0 0.0
    %962 = vmatpush1.msra.mxu0 0.0
    %963 = vmatprep.subr.mxu0 0.0
    %964 = vmatpush1.msra.mxu0 0.0
    %965 = vmatprep.subr.mxu0 0.0
    %966 = vmatpush1.msra.mxu0 0.0
    %967 = vmatprep.subr.mxu0 0.0
    %968 = vmatpush1.msra.mxu0 0.0
    %969 = vmatprep.subr.mxu0 0.0
    %970 = vmatpush1.msra.mxu0 0.0
    %971 = vmatprep.subr.mxu0 0.0
    %972 = vmatpush1.msra.mxu0 0.0
    %973 = vmatprep.mubr.f32.mxu0 0.0
    %974 = vmatmul.mubr.f32.gmra.mrb[0].mxu0 %v898
    %v975 = vpop.f32.mrb[0].mxu0
    %v976 = vadd.f32 0.0, %v975
    %v977 = vpop.f32.mrb[0].mxu0
    %978 = vmatprep.mubr.f32.mxu0 0.0
    %979 = vmatmul.mubr.f32.gmra.mrb[0].mxu0 %v901
    %v980 = vpop.f32.mrb[0].mxu0
    %v981 = vadd.f32 0.0, %v980
    %v982 = vpop.f32.mrb[0].mxu0
    %983 = vmatprep.mubr.f32.mxu0 0.0
    %984 = vmatmul.mubr.f32.gmra.mrb[0].mxu0 %v904
    %v985 = vpop.f32.mrb[0].mxu0
    %v986 = vadd.f32 0.0, %v985
    %v987 = vpop.f32.mrb[0].mxu0
    %988 = vmatprep.mubr.f32.mxu0 0.0
    %989 = vmatmul.mubr.f32.gmra.mrb[0].mxu0 %v907
    %v990 = vpop.f32.mrb[0].mxu0
    %v991 = vadd.f32 0.0, %v990
    %v992 = vpop.f32.mrb[0].mxu0
    %993 = vdwg.mxu0
    %v995 = vsel %vm202, %v62, 0
    %v998 = vsel %vm202, %v63, 0
    %1000 = vmatprep.subr.mxu0 0.0
    %1001 = vmatpush1.msra.mxu0 %v976
    %1002 = vmatprep.subr.mxu0 0.0
    %1003 = vmatpush1.msra.mxu0 %v981
    %1004 = vmatprep.subr.mxu0 0.0
    %1005 = vmatpush1.msra.mxu0 0.0
    %1006 = vmatprep.subr.mxu0 0.0
    %1007 = vmatpush1.msra.mxu0 0.0
    %1008 = vmatprep.subr.mxu0 0.0
    %1009 = vmatpush1.msra.mxu0 0.0
    %1010 = vmatprep.subr.mxu0 0.0
    %1011 = vmatpush1.msra.mxu0 0.0
    %1012 = vmatprep.subr.mxu0 0.0
    %1013 = vmatpush1.msra.mxu0 0.0
    %1014 = vmatprep.subr.mxu0 0.0
    %1015 = vmatpush1.msra.mxu0 0.0
    %1016 = vmatprep.subr.mxu0 0.0
    %1017 = vmatpush1.msra.mxu0 0.0
    %1018 = vmatprep.subr.mxu0 0.0
    %1019 = vmatpush1.msra.mxu0 0.0
    %1020 = vmatprep.subr.mxu0 0.0
    %1021 = vmatpush1.msra.mxu0 0.0
    %1022 = vmatprep.subr.mxu0 0.0
    %1023 = vmatpush1.msra.mxu0 0.0
    %1024 = vmatprep.subr.mxu0 0.0
    %1025 = vmatpush1.msra.mxu0 0.0
    %1026 = vmatprep.subr.mxu0 0.0
    %1027 = vmatpush1.msra.mxu0 0.0
    %1028 = vmatprep.subr.mxu0 0.0
    %1029 = vmatpush1.msra.mxu0 0.0
    %1030 = vmatprep.subr.mxu0 0.0
    %1031 = vmatpush1.msra.mxu0 0.0
    %1032 = vmatprep.subr.mxu0 0.0
    %1033 = vmatpush1.msra.mxu0 0.0
    %1034 = vmatprep.subr.mxu0 0.0
    %1035 = vmatpush1.msra.mxu0 0.0
    %1036 = vmatprep.subr.mxu0 0.0
    %1037 = vmatpush1.msra.mxu0 0.0
    %1038 = vmatprep.subr.mxu0 0.0
    %1039 = vmatpush1.msra.mxu0 0.0
    %1040 = vmatprep.subr.mxu0 0.0
    %1041 = vmatpush1.msra.mxu0 0.0
    %1042 = vmatprep.subr.mxu0 0.0
    %1043 = vmatpush1.msra.mxu0 0.0
    %1044 = vmatprep.subr.mxu0 0.0
    %1045 = vmatpush1.msra.mxu0 0.0
    %1046 = vmatprep.subr.mxu0 0.0
    %1047 = vmatpush1.msra.mxu0 0.0
    %1048 = vmatprep.subr.mxu0 0.0
    %1049 = vmatpush1.msra.mxu0 0.0
    %1050 = vmatprep.subr.mxu0 0.0
    %1051 = vmatpush1.msra.mxu0 0.0
    %1052 = vmatprep.subr.mxu0 0.0
    %1053 = vmatpush1.msra.mxu0 0.0
    %1054 = vmatprep.subr.mxu0 0.0
    %1055 = vmatpush1.msra.mxu0 0.0
    %1056 = vmatprep.subr.mxu0 0.0
    %1057 = vmatpush1.msra.mxu0 0.0
    %1058 = vmatprep.subr.mxu0 0.0
    %1059 = vmatpush1.msra.mxu0 0.0
    %1060 = vmatprep.subr.mxu0 0.0
    %1061 = vmatpush1.msra.mxu0 0.0
    %1062 = vmatprep.subr.mxu0 0.0
    %1063 = vmatpush1.msra.mxu0 0.0
    %1064 = vmatprep.mubr.f32.mxu0 0.0
    %1065 = vmatmul.mubr.f32.gmra.mrb[0].mxu0 %v995
    %v1066 = vpop.f32.mrb[0].mxu0
    %v1067 = vadd.f32 0.0, %v1066
    %v1068 = vpop.f32.mrb[0].mxu0
    %1069 = vmatprep.mubr.f32.mxu0 0.0
    %1070 = vmatmul.mubr.f32.gmra.mrb[0].mxu0 %v998
    %v1071 = vpop.f32.mrb[0].mxu0
    %v1072 = vadd.f32 0.0, %v1071
    %v1073 = vpop.f32.mrb[0].mxu0
    %1074 = vdwg.mxu0
    %v1076 = vsel %vm202, %v70, 0
    %v1079 = vsel %vm202, %v71, 0
    %1081 = vmatprep.subr.mxu0 0.0
    %1082 = vmatpush1.msra.mxu0 %v986
    %1083 = vmatprep.subr.mxu0 0.0
    %1084 = vmatpush1.msra.mxu0 %v991
    %1085 = vmatprep.subr.mxu0 0.0
    %1086 = vmatpush1.msra.mxu0 0.0
    %1087 = vmatprep.subr.mxu0 0.0
    %1088 = vmatpush1.msra.mxu0 0.0
    %1089 = vmatprep.subr.mxu0 0.0
    %1090 = vmatpush1.msra.mxu0 0.0
    %1091 = vmatprep.subr.mxu0 0.0
    %1092 = vmatpush1.msra.mxu0 0.0
    %1093 = vmatprep.subr.mxu0 0.0
    %1094 = vmatpush1.msra.mxu0 0.0
    %1095 = vmatprep.subr.mxu0 0.0
    %1096 = vmatpush1.msra.mxu0 0.0
    %1097 = vmatprep.subr.mxu0 0.0
    %1098 = vmatpush1.msra.mxu0 0.0
    %1099 = vmatprep.subr.mxu0 0.0
    %1100 = vmatpush1.msra.mxu0 0.0
    %1101 = vmatprep.subr.mxu0 0.0
    %1102 = vmatpush1.msra.mxu0 0.0
    %1103 = vmatprep.subr.mxu0 0.0
    %1104 = vmatpush1.msra.mxu0 0.0
    %1105 = vmatprep.subr.mxu0 0.0
    %1106 = vmatpush1.msra.mxu0 0.0
    %1107 = vmatprep.subr.mxu0 0.0
    %1108 = vmatpush1.msra.mxu0 0.0
    %1109 = vmatprep.subr.mxu0 0.0
    %1110 = vmatpush1.msra.mxu0 0.0
    %1111 = vmatprep.subr.mxu0 0.0
    %1112 = vmatpush1.msra.mxu0 0.0
    %1113 = vmatprep.subr.mxu0 0.0
    %1114 = vmatpush1.msra.mxu0 0.0
    %1115 = vmatprep.subr.mxu0 0.0
    %1116 = vmatpush1.msra.mxu0 0.0
    %1117 = vmatprep.subr.mxu0 0.0
    %1118 = vmatpush1.msra.mxu0 0.0
    %1119 = vmatprep.subr.mxu0 0.0
    %1120 = vmatpush1.msra.mxu0 0.0
    %1121 = vmatprep.subr.mxu0 0.0
    %1122 = vmatpush1.msra.mxu0 0.0
    %1123 = vmatprep.subr.mxu0 0.0
    %1124 = vmatpush1.msra.mxu0 0.0
    %1125 = vmatprep.subr.mxu0 0.0
    %1126 = vmatpush1.msra.mxu0 0.0
    %1127 = vmatprep.subr.mxu0 0.0
    %1128 = vmatpush1.msra.mxu0 0.0
    %1129 = vmatprep.subr.mxu0 0.0
    %1130 = vmatpush1.msra.mxu0 0.0
    %1131 = vmatprep.subr.mxu0 0.0
    %1132 = vmatpush1.msra.mxu0 0.0
    %1133 = vmatprep.subr.mxu0 0.0
    %1134 = vmatpush1.msra.mxu0 0.0
    %1135 = vmatprep.subr.mxu0 0.0
    %1136 = vmatpush1.msra.mxu0 0.0
    %1137 = vmatprep.subr.mxu0 0.0
    %1138 = vmatpush1.msra.mxu0 0.0
    %1139 = vmatprep.subr.mxu0 0.0
    %1140 = vmatpush1.msra.mxu0 0.0
    %1141 = vmatprep.subr.mxu0 0.0
    %1142 = vmatpush1.msra.mxu0 0.0
    %1143 = vmatprep.subr.mxu0 0.0
    %1144 = vmatpush1.msra.mxu0 0.0
    %1145 = vmatprep.mubr.f32.mxu0 0.0
    %1146 = vmatmul.mubr.f32.gmra.mrb[0].mxu0 %v1076
    %v1147 = vpop.f32.mrb[0].mxu0
    %v1148 = vadd.f32 0.0, %v1147
    %v1149 = vpop.f32.mrb[0].mxu0
    %1150 = vmatprep.mubr.f32.mxu0 0.0
    %1151 = vmatmul.mubr.f32.gmra.mrb[0].mxu0 %v1079
    %v1152 = vpop.f32.mrb[0].mxu0
    %v1153 = vadd.f32 0.0, %v1152
    %v1154 = vpop.f32.mrb[0].mxu0
    %1155 = vdwg.mxu0
    %s1156 = scalar_lea.vmem [#allocation8], 48
    %1157 = vst.msk [vmem:[%s1156] sm:$0xff] %vm104, %v1067
    %1158 = vst.msk [vmem:[%s1156 + $0x8] sm:$0xff] %vm104, %v1072
    %1159 = vst.msk [vmem:[%s1156 + $0x40] sm:$0xff] %vm104, %v1148
    %1160 = vst.msk [vmem:[%s1156 + $0x48] sm:$0xff] %vm104, %v1153
    // Predicated region
    $region26: #{tpu_custom_call.1} parent=1 // pred_check
      _
    $region27: #{tpu_custom_call.1} parent=1 // pred_check_branch
      %1162 = sbr.rel (0) target = $region29
    $region28: #{tpu_custom_call.1} parent=1 // pred_region
      %s1164 = ssub.s32 2048, 2048
      %1165 = vsyncadd [#allocation4], %s1164
      %s1166 = sshll.u32 [#allocation8], 4
      %s1167 = int_to_ptr.vmem [resolvable:$true] %s1166
      %1172 = dma.vmem_to_hbm [thread:$0]  %s1167, 2048, %s3, [#allocation4], 128, 128, 8
    $region29: #{tpu_custom_call.1} parent=1 // pred_fallthru
      _
    // Predicated region
    $region30: #{tpu_custom_call.1} parent=1 // pred_check
      _
    $region31: #{tpu_custom_call.1} parent=1 // pred_check_branch
      %1174 = sbr.rel (0) target = $region33
    $region32: #{tpu_custom_call.1} parent=1 // pred_region
      %1175 = dma.done [#allocation4], 2048
    $region33: #{tpu_custom_call.1} parent=1 // pred_fallthru
      _
    %1176 = vsyncpa [#allocation3], 1
    %1177 = vsyncpa [#allocation6], 1
    %1178 = vsyncpa [#allocation4], 1

</llo_original>
